<compile_context>
chip_gen: v6e
topology: v6e:2x2x1
jax: 0.10.0
libtpu: 0.0.40
codegen_flags: <defaults>
</compile_context>

<pallas_src>
import functools

import jax
import jax.numpy as jnp
import numpy as np
from jax.experimental import pallas as pl
from jax.experimental.pallas import tpu as pltpu


def _round_up(x, m):
    return ((x + m - 1) // m) * m


def _num_tensorcores():
    # 2 TensorCores per chip only on v7x; v5e/v6e have 1.
    try:
        kind = jax.devices()[0].device_kind.lower()
    except Exception:
        return 1
    return 2 if "v7" in kind else 1


def _ce_kernel(x_ref, t_ref, out_ref, acc_ref, *, n_valid, blocks_per_core):
    p = pl.program_id(0)          # parallel axis (megacore split on v7x)
    i = pl.program_id(1)          # reduction axis over column blocks

    @pl.when(i == 0)
    def _init():
        acc_ref[...] = jnp.zeros_like(acc_ref)

    x = x_ref[...].astype(jnp.float32)      # (C, tn): classes on sublanes
    t = t_ref[...]                          # (1, tn): int32 labels, lane-dense
    c, tn = x.shape

    # Per-sample (per-column) stable log-sum-exp.  The reference's global-max
    # subtraction is a shift that softmax cancels, so it is dropped.
    col_max = jnp.max(x, axis=0, keepdims=True)                        # (1,tn)
    sum_exp = jnp.sum(jnp.exp(x - col_max), axis=0, keepdims=True)     # (1,tn)
    lse = col_max + jnp.log(sum_exp)                 # lane-dense EUP log

    # Target-class logit via sublane-iota compare (no softmax / log(p) tensor).
    cls = jax.lax.broadcasted_iota(jnp.int32, (c, tn), 0)
    x_tgt = jnp.sum(jnp.where(cls == t, x, 0.0), axis=0, keepdims=True)

    loss = lse - x_tgt                                                 # (1,tn)

    # Select-mask the (garbage) columns of the partially out-of-bounds tail
    # block; select (not multiply) so NaN/Inf garbage cannot leak through.
    col0 = (p * blocks_per_core + i) * tn
    col_ids = col0 + jax.lax.broadcasted_iota(jnp.int32, (1, tn), 1)
    loss = jnp.where(col_ids < n_valid, loss, 0.0)

    acc_ref[...] += loss          # lane-dense VPU add, <= tn/128 vregs / step

    @pl.when(i == pl.num_programs(1) - 1)
    def _finalize():
        total = jnp.sum(acc_ref[...])     # one cross-lane reduce per p slice
        out_ref[...] = jnp.full(out_ref.shape, total, dtype=jnp.float32)


def cross_entropy_loss_class_major(x_cm, target, size_average=True,
                                   block_cols=2048):
    """x_cm: (C, N) logits (f32 or bf16, class-major); target: (N,) int ids."""
    c, n = x_cm.shape
    itemsize = jnp.dtype(x_cm.dtype).itemsize
    c_sub = _round_up(c, 8)

    # Column tile: multiple of 128 lanes, capped so double-buffered logits
    # tiles stay in the low-MiB range on every generation (incl. v7x 64 MiB).
    tn_cap = max(128, ((2 * 1024 * 1024) // (c_sub * itemsize)) // 128 * 128)
    tn = max(128, min(_round_up(block_cols, 128), tn_cap))

    n_blocks = pl.cdiv(n, tn)
    num_par = _num_tensorcores()
    if n_blocks < 2 or n_blocks % num_par != 0:
        num_par = 1               # v5e/v6e, or uneven block count on v7x
    bpc = n_blocks // num_par

    t_cm = target.astype(jnp.int32).reshape(1, n)   # lane-dense, contiguous

    kernel = functools.partial(_ce_kernel, n_valid=n, blocks_per_core=bpc)

    out = pl.pallas_call(
        kernel,
        out_shape=jax.ShapeDtypeStruct((num_par * 8, 128), jnp.float32),
        grid=(num_par, bpc),
        in_specs=[
            pl.BlockSpec((c, tn), lambda p, i: (0, p * bpc + i)),
            pl.BlockSpec((1, tn), lambda p, i: (0, p * bpc + i)),
        ],
        out_specs=pl.BlockSpec((8, 128), lambda p, i: (p, 0)),
        scratch_shapes=[pltpu.VMEM((1, tn), jnp.float32)],
        compiler_params=pltpu.CompilerParams(
            dimension_semantics=("parallel", "arbitrary"),
        ),
    )(x_cm, t_cm)

    # One partial sum per parallel slice (first row of each (8,128) out tile).
    total = jnp.sum(out[0::8, 0])
    if size_average:
        return total / jnp.float32(n)
    return total


def cross_entropy_loss(inputs, target, size_average=True, block_cols=2048):
    """inputs: (N, C) logits (f32 or bf16); target: (N,) int class ids.

    Transposes once to class-major (one HBM pass).  Producers that already
    hold class-major logits (e.g. NCHW segmentation heads) should call
    cross_entropy_loss_class_major directly and avoid the transpose.
    """
    x_cm = jnp.transpose(inputs)
    return cross_entropy_loss_class_major(x_cm, target, size_average,
                                          block_cols)


def _reference(inputs, target, size_average=True):
    # Pure-JAX mirror of the PyTorch forward (default flags).
    x = inputs.astype(jnp.float32)
    n, c = x.shape
    onehot = jax.nn.one_hot(target, c, dtype=jnp.float32)
    xn = x - jnp.max(x)
    p = jax.nn.softmax(xn, axis=-1)
    loss = -jnp.sum(onehot * jnp.log(p + 1e-30), axis=-1)
    return jnp.mean(loss) if size_average else jnp.sum(loss)


if __name__ == "__main__":
    key = jax.random.PRNGKey(0)

    def check(name, got, x_nc, t, size_average=True, atol=1e-4, rtol=1e-5):
        jax.block_until_ready(got)
        want = _reference(x_nc, t, size_average=size_average)
        assert np.allclose(np.asarray(got), np.asarray(want),
                           rtol=rtol, atol=atol), f"{name}: pallas={got} ref={want}"

    k1, k2, k3, k4, k5, k6, k7, k8 = jax.random.split(key, 8)

    # Case 1: segmentation-like batch, N = B*H*W = 2*16*16 = 512 rows, C = 19.
    n1, c1 = 512, 19
    x1 = jax.random.normal(k1, (n1, c1), dtype=jnp.float32) * 3.0
    t1 = jax.random.randint(k2, (n1,), 0, c1, dtype=jnp.int32)
    check("case1_mean", cross_entropy_loss(x1, t1), x1, t1)
    check("case1_sum", cross_entropy_loss(x1, t1, size_average=False),
          x1, t1, size_average=False, atol=1e-3)

    # Case 2: multi-block grid with a partially out-of-bounds tail block.
    n2, c2 = 600, 21
    x2 = jax.random.normal(k3, (n2, c2), dtype=jnp.float32) * 3.0
    t2 = jax.random.randint(k4, (n2,), 0, c2, dtype=jnp.int32)
    check("case2_mean", cross_entropy_loss(x2, t2, block_cols=256), x2, t2,
          atol=1e-3)

    # Case 3: N smaller than one tile (single masked partial block).
    n3, c3 = 200, 19
    x3 = jax.random.normal(k5, (n3, c3), dtype=jnp.float32) * 3.0
    t3 = jax.random.randint(k6, (n3,), 0, c3, dtype=jnp.int32)
    check("case3_small_n", cross_entropy_loss(x3, t3), x3, t3, atol=1e-3)

    # Case 4: class-major bf16 logits fed directly (no wrapper transpose).
    n4, c4 = 512, 32
    x4_cm = (jax.random.normal(k7, (c4, n4), dtype=jnp.float32) * 3.0
             ).astype(jnp.bfloat16)
    t4 = jax.random.randint(k8, (n4,), 0, c4, dtype=jnp.int32)
    got4 = cross_entropy_loss_class_major(x4_cm, t4)
    check("case4_bf16_class_major", got4, jnp.transpose(x4_cm), t4, atol=1e-3)

    print("KERNEL_OK")
</pallas_src>

<mosaic_0001>
module attributes {stable_mosaic.version = 11 : i64} {
  func.func @_ce_kernel(%arg0: i32, %arg1: i32, %arg2: memref<19x2048xf32, #tpu.memory_space<vmem>>, %arg3: memref<1x2048xi32, #tpu.memory_space<vmem>>, %arg4: memref<8x128xf32, #tpu.memory_space<vmem>>, %arg5: memref<1x2048xf32, #tpu.memory_space<vmem>>) attributes {dimension_semantics = [#tpu.dimension_semantics<parallel>, #tpu.dimension_semantics<arbitrary>], iteration_bounds = array<i64: 1, 1>, scalar_prefetch = 0 : i64, scratch_operands = 1 : i64, tpu.core_type = #tpu.core_type<tc>, window_params = [{transform_indices = @transform_0, window_bounds = array<i64: 19, 2048>}, {transform_indices = @transform_1, window_bounds = array<i64: 1, 2048>}, {transform_indices = @transform_2, window_bounds = array<i64: 8, 128>}]} {
    %c0_i32 = arith.constant 0 : i32
    %0 = arith.cmpi eq, %arg1, %c0_i32 : i32
    %1 = arith.extui %0 : i1 to i32
    %c0_i32_0 = arith.constant 0 : i32
    %2 = arith.cmpi ne, %1, %c0_i32_0 : i32
    scf.if %2 {
      %cst_14 = arith.constant 0.000000e+00 : f32
      %38 = vector.broadcast %cst_14 : f32 to vector<1x2048xf32>
      %c0_15 = arith.constant 0 : index
      %c0_16 = arith.constant 0 : index
      %39 = vector.load %arg5[%c0_15, %c0_16] : memref<1x2048xf32, #tpu.memory_space<vmem>>, vector<1x2048xf32>
      tpu.vector_store %arg5[%c0_15, %c0_16], %38 {strides = array<i32>} : memref<1x2048xf32, #tpu.memory_space<vmem>>, vector<1x2048xf32>,
    } else {
    }
    %c0 = arith.constant 0 : index
    %c0_1 = arith.constant 0 : index
    %3 = vector.load %arg2[%c0, %c0_1] : memref<19x2048xf32, #tpu.memory_space<vmem>>, vector<19x2048xf32>
    %c0_2 = arith.constant 0 : index
    %c0_3 = arith.constant 0 : index
    %4 = vector.load %arg3[%c0_2, %c0_3] : memref<1x2048xi32, #tpu.memory_space<vmem>>, vector<1x2048xi32>
    %cst = arith.constant dense<0xFF800000> : vector<2048xf32>
    %5 = vector.multi_reduction <maximumf>, %3, %cst [0] : vector<19x2048xf32> to vector<2048xf32>
    %6 = vector.shape_cast %5 : vector<2048xf32> to vector<1x2048xf32>
    %7 = vector.broadcast %6 : vector<1x2048xf32> to vector<19x2048xf32>
    %8 = arith.subf %3, %7 : vector<19x2048xf32>
    %9 = math.exp %8 : vector<19x2048xf32>
    %cst_4 = arith.constant dense<0.000000e+00> : vector<2048xf32>
    %10 = vector.multi_reduction <add>, %9, %cst_4 [0] : vector<19x2048xf32> to vector<2048xf32>
    %11 = vector.shape_cast %10 : vector<2048xf32> to vector<1x2048xf32>
    %12 = math.log %11 : vector<1x2048xf32>
    %13 = arith.addf %6, %12 : vector<1x2048xf32>
    %14 = tpu.iota {dimensions = array<i32: 0>} : vector<19x2048xi32>
    %15 = vector.broadcast %4 : vector<1x2048xi32> to vector<19x2048xi32>
    %16 = arith.cmpi eq, %14, %15 : vector<19x2048xi32>
    %cst_5 = arith.constant 0.000000e+00 : f32
    %17 = vector.broadcast %cst_5 : f32 to vector<19x2048xf32>
    %18 = arith.select %16, %3, %17 : vector<19x2048xi1>, vector<19x2048xf32>
    %cst_6 = arith.constant dense<0.000000e+00> : vector<2048xf32>
    %19 = vector.multi_reduction <add>, %18, %cst_6 [0] : vector<19x2048xf32> to vector<2048xf32>
    %20 = vector.shape_cast %19 : vector<2048xf32> to vector<1x2048xf32>
    %21 = arith.subf %13, %20 : vector<1x2048xf32>
    %c1_i32 = arith.constant 1 : i32
    %22 = arith.muli %arg0, %c1_i32 : i32
    %23 = arith.addi %22, %arg1 : i32
    %c2048_i32 = arith.constant 2048 : i32
    %24 = arith.muli %23, %c2048_i32 : i32
    %25 = tpu.iota {dimensions = array<i32: 1>} : vector<1x2048xi32>
    %26 = vector.broadcast %24 : i32 to vector<1x2048xi32>
    %27 = arith.addi %26, %25 : vector<1x2048xi32>
    %c512_i32 = arith.constant 512 : i32
    %28 = vector.broadcast %c512_i32 : i32 to vector<1x2048xi32>
    %29 = arith.cmpi slt, %27, %28 : vector<1x2048xi32>
    %cst_7 = arith.constant 0.000000e+00 : f32
    %30 = vector.broadcast %cst_7 : f32 to vector<1x2048xf32>
    %31 = arith.select %29, %21, %30 : vector<1x2048xi1>, vector<1x2048xf32>
    %c0_8 = arith.constant 0 : index
    %c0_9 = arith.constant 0 : index
    %32 = vector.load %arg5[%c0_8, %c0_9] : memref<1x2048xf32, #tpu.memory_space<vmem>>, vector<1x2048xf32>
    %33 = arith.addf %32, %31 : vector<1x2048xf32>
    %c0_10 = arith.constant 0 : index
    %c0_11 = arith.constant 0 : index
    %34 = vector.load %arg5[%c0_10, %c0_11] : memref<1x2048xf32, #tpu.memory_space<vmem>>, vector<1x2048xf32>
    tpu.vector_store %arg5[%c0_10, %c0_11], %33 {strides = array<i32>} : memref<1x2048xf32, #tpu.memory_space<vmem>>, vector<1x2048xf32>,
    %c0_i32_12 = arith.constant 0 : i32
    %35 = arith.cmpi eq, %arg1, %c0_i32_12 : i32
    %36 = arith.extui %35 : i1 to i32
    %c0_i32_13 = arith.constant 0 : i32
    %37 = arith.cmpi ne, %36, %c0_i32_13 : i32
    scf.if %37 {
      %c0_14 = arith.constant 0 : index
      %c0_15 = arith.constant 0 : index
      %38 = vector.load %arg5[%c0_14, %c0_15] : memref<1x2048xf32, #tpu.memory_space<vmem>>, vector<1x2048xf32>
      %39 = vector.shape_cast %38 : vector<1x2048xf32> to vector<1x1x2048xf32>
      %cst_16 = arith.constant dense<0.000000e+00> : vector<1xf32>
      %40 = vector.multi_reduction <add>, %39, %cst_16 [1, 2] : vector<1x1x2048xf32> to vector<1xf32>
      %41 = vector.shape_cast %40 : vector<1xf32> to vector<1x1x1xf32>
      %42 = vector.extract %41[0, 0, 0] : f32 from vector<1x1x1xf32>
      %43 = vector.broadcast %42 : f32 to vector<8x128xf32>
      %c0_17 = arith.constant 0 : index
      %c0_18 = arith.constant 0 : index
      %44 = vector.load %arg4[%c0_17, %c0_18] : memref<8x128xf32, #tpu.memory_space<vmem>>, vector<8x128xf32>
      tpu.vector_store %arg4[%c0_17, %c0_18], %43 {strides = array<i32>} : memref<8x128xf32, #tpu.memory_space<vmem>>, vector<8x128xf32>,
    } else {
    }
    return
  }
  func.func @transform_0(%arg0: i32, %arg1: i32) -> (i32, i32) {
    %c1_i32 = arith.constant 1 : i32
    %0 = arith.muli %arg0, %c1_i32 : i32
    %1 = arith.addi %0, %arg1 : i32
    %c0_i32 = arith.constant 0 : i32
    %c0_i32_0 = arith.constant 0 : i32
    return %c0_i32, %1 : i32, i32
  }
  func.func @transform_1(%arg0: i32, %arg1: i32) -> (i32, i32) {
    %c1_i32 = arith.constant 1 : i32
    %0 = arith.muli %arg0, %c1_i32 : i32
    %1 = arith.addi %0, %arg1 : i32
    %c0_i32 = arith.constant 0 : i32
    %c0_i32_0 = arith.constant 0 : i32
    return %c0_i32, %1 : i32, i32
  }
  func.func @transform_2(%arg0: i32, %arg1: i32) -> (i32, i32) {
    %c0_i32 = arith.constant 0 : i32
    %c0_i32_0 = arith.constant 0 : i32
    return %arg0, %c0_i32 : i32, i32
  }
}

</mosaic_0001>

<llo_original>
// kernel: tpu_custom_call.1
$region0: #{tpu_custom_call.1}
  #allocation0 [shape = 'u32[]', space=smem, size = 0x4, offset = 0x4, fixed_abs, tag = 'smem constant byte address 0x4 - core index']
  #allocation1 [shape = 'u32[144,128]{1,0:T(1,128)}', space=vmem, size = 0x12000, scoped, tag = 'internal scratch']
  #allocation2 [shape = 'f32[1,2048]{1,0:T(1,128)}', space=vmem, size = 0x2000, scoped, tag = 'scratch operand']
  %s0 = inlined_call_operand.hbm [shape: f32[19,512], index: 0, kind: input, shape index: {}]
  %s1 = inlined_call_operand.hbm [shape: s32[1,512], index: 1, kind: input, shape index: {}]
  %s2 = inlined_call_operand.hbm [shape: f32[8,128], index: 2, kind: output, shape index: {}]
  %s3 = sld [smem:[#allocation0]]
  $region34: #{tpu_custom_call.1} parent=0
    _
  %s5 = ssub.s32 1, %s3
  %s6 = scalar_select 0, %s5, %s3
  $region1: #{tpu_custom_call.1} parent=0
    #allocation3 [shape = 'u8[196608]{0}', space=vmem, size = 0x30000, scoped, tag = 'input window, operand 0, single buffered']
    #allocation4 [shape = 's32[1]{0}', space=sflag, size = 0x4, scoped, tag = 'scoped memory for tpu_custom_call.1']
    #allocation5 [shape = 's32[1]{0}', space=sflag, size = 0x4, scoped, tag = 'scoped memory for tpu_custom_call.1']
    #allocation6 [shape = 'u8[8192]{0}', space=vmem, size = 0x2000, scoped, tag = 'input window, operand 1, single buffered']
    #allocation7 [shape = 's32[1]{0}', space=sflag, size = 0x4, scoped, tag = 'scoped memory for tpu_custom_call.1']
    #allocation8 [shape = 'u8[4096]{0}', space=vmem, size = 0x1000, scoped, tag = 'output window, operand 0, single buffered']
    %7 = vsyncpa [#allocation4], 0
    %8 = vsyncpa [#allocation7], 0
    %9 = vsyncpa [#allocation5], 0
    // Predicated region
    $region2: #{tpu_custom_call.1} parent=1 // pred_check
      _
    $region3: #{tpu_custom_call.1} parent=1 // pred_check_branch
      %11 = sbr.rel (0) target = $region5
    $region4: #{tpu_custom_call.1} parent=1 // pred_region
      %s12 = sadd.s32 0, 0
      %s13 = smul.u32 16, %s12
      %s14 = ssub.s32 4, %s13
      %s15 = smul.u32 384, %s14
      %s17 = ssub.s32 6144, %s15
      %18 = vsyncadd [#allocation4], %s17
      %p19 = scmp.ne.s32.totalorder 0, %s15
      %s20 = smul.addr %s13, 128
      %s21 = scalar_lea.hbm %s0, %s20
      %s22 = smul.u32 %s14, 8
      %s23 = smul.u32 %s22, 3
      %s24 = sshll.u32 [#allocation3], 4
      %s25 = int_to_ptr.vmem [resolvable:$true] %s24
      %s26 = sshll.u32 %s23, 4
      %30 = dma.hbm_to_vmem [thread:$0]  (%p19), %s21, %s26, %s25, [#allocation4], 512, 2048, %s22
    $region5: #{tpu_custom_call.1} parent=1 // pred_fallthru
      _
    // Predicated region
    $region6: #{tpu_custom_call.1} parent=1 // pred_check
      _
    $region7: #{tpu_custom_call.1} parent=1 // pred_check_branch
      %32 = sbr.rel (0) target = $region9
    $region8: #{tpu_custom_call.1} parent=1 // pred_region
      %s33 = sadd.s32 0, 0
      %s34 = smul.u32 16, %s33
      %s35 = ssub.s32 4, %s34
      %s36 = smul.u32 16, %s35
      %s38 = ssub.s32 256, %s36
      %39 = vsyncadd [#allocation7], %s38
      %p40 = scmp.ne.s32.totalorder 0, %s36
      %s41 = smul.addr %s34, 16
      %s42 = scalar_lea.hbm %s1, %s41
      %s43 = sshll.u32 %s35, 4
      %s44 = sshll.u32 [#allocation6], 4
      %s45 = int_to_ptr.vmem [resolvable:$true] %s44
      %47 = dma.hbm_to_vmem [thread:$0]  (%p40), %s42, %s43, %s45, [#allocation7]
    $region9: #{tpu_custom_call.1} parent=1 // pred_fallthru
      _
    // Predicated region
    $region10: #{tpu_custom_call.1} parent=1 // pred_check
      _
    $region11: #{tpu_custom_call.1} parent=1 // pred_check_branch
      %49 = sbr.rel (0) target = $region13
    $region12: #{tpu_custom_call.1} parent=1 // pred_region
      %50 = dma.done [#allocation4], 6144
    $region13: #{tpu_custom_call.1} parent=1 // pred_fallthru
      _
    // Predicated region
    $region14: #{tpu_custom_call.1} parent=1 // pred_check
      _
    $region15: #{tpu_custom_call.1} parent=1 // pred_check_branch
      %52 = sbr.rel (0) target = $region17
    $region16: #{tpu_custom_call.1} parent=1 // pred_region
      %53 = dma.done [#allocation7], 256
    $region17: #{tpu_custom_call.1} parent=1 // pred_fallthru
      _
    %s54 = sadd.s32 0, 0
    %s55 = smul.u32 16, %s54
    %s56 = ssub.s32 4, %s55
    %s57 = smul.u32 384, %s56
    %s58 = sadd.s32 0, 0
    %s59 = smul.u32 16, %s58
    %s60 = ssub.s32 4, %s59
    %s61 = smul.u32 16, %s60
    %p62 = scmp.eq.s32.totalorder 0, 0
    // Predicated region
    $region18: #{tpu_custom_call.1} parent=1 // pred_check
      %p63 = pneg %p62
    $region19: #{tpu_custom_call.1} parent=1 // pred_check_branch
      %65 = sbr.rel (%p63) target = $region21
    $region20: #{tpu_custom_call.1} parent=1 // pred_region
      %66 = vst [vmem:[#allocation2] sm:$0xff] 0.0
      %67 = vst [vmem:[#allocation2 + $0x8] sm:$0xff] 0.0
    $region21: #{tpu_custom_call.1} parent=1 // pred_fallthru
      _
    %v68 = vld [vmem:[#allocation3] sm:$0xff]
    %v69 = vld [vmem:[#allocation3 + $0x8] sm:$0xff]
    %v70 = vld [vmem:[#allocation3 + $0x10] sm:$0xff]
    %v71 = vld [vmem:[#allocation3 + $0x18] sm:$0xff]
    %v72 = vld [vmem:[#allocation3 + $0x20] sm:$0xff]
    %v73 = vld [vmem:[#allocation3 + $0x28] sm:$0xff]
    %v74 = vld [vmem:[#allocation3 + $0x30] sm:$0xff]
    %v75 = vld [vmem:[#allocation3 + $0x38] sm:$0xff]
    %v76 = vld [vmem:[#allocation3 + $0x40] sm:$0xff]
    %v77 = vld [vmem:[#allocation3 + $0x48] sm:$0xff]
    %v78 = vld [vmem:[#allocation3 + $0x50] sm:$0xff]
    %v79 = vld [vmem:[#allocation3 + $0x58] sm:$0xff]
    %v80 = vld [vmem:[#allocation3 + $0x60] sm:$0xff]
    %v81 = vld [vmem:[#allocation3 + $0x68] sm:$0xff]
    %v82 = vld [vmem:[#allocation3 + $0x70] sm:$0xff]
    %v83 = vld [vmem:[#allocation3 + $0x78] sm:$0xff]
    %v84 = vld [vmem:[#allocation3 + $0x80] sm:$0xff]
    %v85 = vld [vmem:[#allocation3 + $0x88] sm:$0xff]
    %v86 = vld [vmem:[#allocation3 + $0x90] sm:$0xff]
    %v87 = vld [vmem:[#allocation3 + $0x98] sm:$0xff]
    %v88 = vld [vmem:[#allocation3 + $0xa0] sm:$0xff]
    %v89 = vld [vmem:[#allocation3 + $0xa8] sm:$0xff]
    %v90 = vld [vmem:[#allocation3 + $0xb0] sm:$0xff]
    %v91 = vld [vmem:[#allocation3 + $0xb8] sm:$0xff]
    %v92 = vld [vmem:[#allocation3 + $0xc0] sm:$0xff]
    %v93 = vld [vmem:[#allocation3 + $0xc8] sm:$0xff]
    %v94 = vld [vmem:[#allocation3 + $0xd0] sm:$0xff]
    %v95 = vld [vmem:[#allocation3 + $0xd8] sm:$0xff]
    %v96 = vld [vmem:[#allocation3 + $0xe0] sm:$0xff]
    %v97 = vld [vmem:[#allocation3 + $0xe8] sm:$0xff]
    %v98 = vld [vmem:[#allocation3 + $0xf0] sm:$0xff]
    %v99 = vld [vmem:[#allocation3 + $0xf8] sm:$0xff]
    %v100 = vld [vmem:[#allocation3 + $0x100] sm:$0x7]
    %v101 = vld [vmem:[#allocation3 + $0x108] sm:$0x7]
    %v102 = vld [vmem:[#allocation3 + $0x110] sm:$0x7]
    %v103 = vld [vmem:[#allocation3 + $0x118] sm:$0x7]
    %v104 = vld [vmem:[#allocation3 + $0x120] sm:$0x7]
    %v105 = vld [vmem:[#allocation3 + $0x128] sm:$0x7]
    %v106 = vld [vmem:[#allocation3 + $0x130] sm:$0x7]
    %v107 = vld [vmem:[#allocation3 + $0x138] sm:$0x7]
    %v108 = vld [vmem:[#allocation3 + $0x140] sm:$0x7]
    %v109 = vld [vmem:[#allocation3 + $0x148] sm:$0x7]
    %v110 = vld [vmem:[#allocation3 + $0x150] sm:$0x7]
    %v111 = vld [vmem:[#allocation3 + $0x158] sm:$0x7]
    %v112 = vld [vmem:[#allocation3 + $0x160] sm:$0x7]
    %v113 = vld [vmem:[#allocation3 + $0x168] sm:$0x7]
    %v114 = vld [vmem:[#allocation3 + $0x170] sm:$0x7]
    %v115 = vld [vmem:[#allocation3 + $0x178] sm:$0x7]
    %v116 = vld [vmem:[#allocation6] sm:$0xff]
    %v117 = vld [vmem:[#allocation6 + $0x8] sm:$0xff]
    %v118 = vmax.f32 %v68, %v84
    %vm119 = vcmask 1042432
    %v120 = vsel %vm119, %v100, -inf
    %v121 = vmax.f32 %v118, %v120
    %v122 = vrot.slane %v121, 4
    %v123 = vmax.f32 %v121, %v122
    %v124 = vrot.slane %v123, 2
    %v125 = vmax.f32 %v123, %v124
    %v126 = vrot.slane %v125, 1
    %v127 = vmax.f32 %v125, %v126
    %v128 = vmax.f32 %v69, %v85
    %v129 = vsel %vm119, %v101, -inf
    %v130 = vmax.f32 %v128, %v129
    %v131 = vrot.slane %v130, 4
    %v132 = vmax.f32 %v130, %v131
    %v133 = vrot.slane %v132, 2
    %v134 = vmax.f32 %v132, %v133
    %v135 = vrot.slane %v134, 1
    %v136 = vmax.f32 %v134, %v135
    %v137 = vmax.f32 %v70, %v86
    %v138 = vsel %vm119, %v102, -inf
    %v139 = vmax.f32 %v137, %v138
    %v140 = vrot.slane %v139, 4
    %v141 = vmax.f32 %v139, %v140
    %v142 = vrot.slane %v141, 2
    %v143 = vmax.f32 %v141, %v142
    %v144 = vrot.slane %v143, 1
    %v145 = vmax.f32 %v143, %v144
    %v146 = vmax.f32 %v71, %v87
    %v147 = vsel %vm119, %v103, -inf
    %v148 = vmax.f32 %v146, %v147
    %v149 = vrot.slane %v148, 4
    %v150 = vmax.f32 %v148, %v149
    %v151 = vrot.slane %v150, 2
    %v152 = vmax.f32 %v150, %v151
    %v153 = vrot.slane %v152, 1
    %v154 = vmax.f32 %v152, %v153
    %v155 = vmax.f32 %v72, %v88
    %v156 = vsel %vm119, %v104, -inf
    %v157 = vmax.f32 %v155, %v156
    %v158 = vrot.slane %v157, 4
    %v159 = vmax.f32 %v157, %v158
    %v160 = vrot.slane %v159, 2
    %v161 = vmax.f32 %v159, %v160
    %v162 = vrot.slane %v161, 1
    %v163 = vmax.f32 %v161, %v162
    %v164 = vmax.f32 %v73, %v89
    %v165 = vsel %vm119, %v105, -inf
    %v166 = vmax.f32 %v164, %v165
    %v167 = vrot.slane %v166, 4
    %v168 = vmax.f32 %v166, %v167
    %v169 = vrot.slane %v168, 2
    %v170 = vmax.f32 %v168, %v169
    %v171 = vrot.slane %v170, 1
    %v172 = vmax.f32 %v170, %v171
    %v173 = vmax.f32 %v74, %v90
    %v174 = vsel %vm119, %v106, -inf
    %v175 = vmax.f32 %v173, %v174
    %v176 = vrot.slane %v175, 4
    %v177 = vmax.f32 %v175, %v176
    %v178 = vrot.slane %v177, 2
    %v179 = vmax.f32 %v177, %v178
    %v180 = vrot.slane %v179, 1
    %v181 = vmax.f32 %v179, %v180
    %v182 = vmax.f32 %v75, %v91
    %v183 = vsel %vm119, %v107, -inf
    %v184 = vmax.f32 %v182, %v183
    %v185 = vrot.slane %v184, 4
    %v186 = vmax.f32 %v184, %v185
    %v187 = vrot.slane %v186, 2
    %v188 = vmax.f32 %v186, %v187
    %v189 = vrot.slane %v188, 1
    %v190 = vmax.f32 %v188, %v189
    %v191 = vmax.f32 %v76, %v92
    %v192 = vsel %vm119, %v108, -inf
    %v193 = vmax.f32 %v191, %v192
    %v194 = vrot.slane %v193, 4
    %v195 = vmax.f32 %v193, %v194
    %v196 = vrot.slane %v195, 2
    %v197 = vmax.f32 %v195, %v196
    %v198 = vrot.slane %v197, 1
    %v199 = vmax.f32 %v197, %v198
    %v200 = vmax.f32 %v77, %v93
    %v201 = vsel %vm119, %v109, -inf
    %v202 = vmax.f32 %v200, %v201
    %v203 = vrot.slane %v202, 4
    %v204 = vmax.f32 %v202, %v203
    %v205 = vrot.slane %v204, 2
    %v206 = vmax.f32 %v204, %v205
    %v207 = vrot.slane %v206, 1
    %v208 = vmax.f32 %v206, %v207
    %v209 = vmax.f32 %v78, %v94
    %v210 = vsel %vm119, %v110, -inf
    %v211 = vmax.f32 %v209, %v210
    %v212 = vrot.slane %v211, 4
    %v213 = vmax.f32 %v211, %v212
    %v214 = vrot.slane %v213, 2
    %v215 = vmax.f32 %v213, %v214
    %v216 = vrot.slane %v215, 1
    %v217 = vmax.f32 %v215, %v216
    %v218 = vmax.f32 %v79, %v95
    %v219 = vsel %vm119, %v111, -inf
    %v220 = vmax.f32 %v218, %v219
    %v221 = vrot.slane %v220, 4
    %v222 = vmax.f32 %v220, %v221
    %v223 = vrot.slane %v222, 2
    %v224 = vmax.f32 %v222, %v223
    %v225 = vrot.slane %v224, 1
    %v226 = vmax.f32 %v224, %v225
    %v227 = vmax.f32 %v80, %v96
    %v228 = vsel %vm119, %v112, -inf
    %v229 = vmax.f32 %v227, %v228
    %v230 = vrot.slane %v229, 4
    %v231 = vmax.f32 %v229, %v230
    %v232 = vrot.slane %v231, 2
    %v233 = vmax.f32 %v231, %v232
    %v234 = vrot.slane %v233, 1
    %v235 = vmax.f32 %v233, %v234
    %v236 = vmax.f32 %v81, %v97
    %v237 = vsel %vm119, %v113, -inf
    %v238 = vmax.f32 %v236, %v237
    %v239 = vrot.slane %v238, 4
    %v240 = vmax.f32 %v238, %v239
    %v241 = vrot.slane %v240, 2
    %v242 = vmax.f32 %v240, %v241
    %v243 = vrot.slane %v242, 1
    %v244 = vmax.f32 %v242, %v243
    %v245 = vmax.f32 %v82, %v98
    %v246 = vsel %vm119, %v114, -inf
    %v247 = vmax.f32 %v245, %v246
    %v248 = vrot.slane %v247, 4
    %v249 = vmax.f32 %v247, %v248
    %v250 = vrot.slane %v249, 2
    %v251 = vmax.f32 %v249, %v250
    %v252 = vrot.slane %v251, 1
    %v253 = vmax.f32 %v251, %v252
    %v254 = vmax.f32 %v83, %v99
    %v255 = vsel %vm119, %v115, -inf
    %v256 = vmax.f32 %v254, %v255
    %v257 = vrot.slane %v256, 4
    %v258 = vmax.f32 %v256, %v257
    %v259 = vrot.slane %v258, 2
    %v260 = vmax.f32 %v258, %v259
    %v261 = vrot.slane %v260, 1
    %v262 = vmax.f32 %v260, %v261
    %v263 = vsub.f32 %v68, %v127
    %v264 = vsub.f32 %v69, %v136
    %v265 = vsub.f32 %v70, %v145
    %v266 = vsub.f32 %v71, %v154
    %v267 = vsub.f32 %v72, %v163
    %v268 = vsub.f32 %v73, %v172
    %v269 = vsub.f32 %v74, %v181
    %v270 = vsub.f32 %v75, %v190
    %v271 = vsub.f32 %v76, %v199
    %v272 = vsub.f32 %v77, %v208
    %v273 = vsub.f32 %v78, %v217
    %v274 = vsub.f32 %v79, %v226
    %v275 = vsub.f32 %v80, %v235
    %v276 = vsub.f32 %v81, %v244
    %v277 = vsub.f32 %v82, %v253
    %v278 = vsub.f32 %v83, %v262
    %v279 = vsub.f32 %v84, %v127
    %v280 = vsub.f32 %v85, %v136
    %v281 = vsub.f32 %v86, %v145
    %v282 = vsub.f32 %v87, %v154
    %v283 = vsub.f32 %v88, %v163
    %v284 = vsub.f32 %v89, %v172
    %v285 = vsub.f32 %v90, %v181
    %v286 = vsub.f32 %v91, %v190
    %v287 = vsub.f32 %v92, %v199
    %v288 = vsub.f32 %v93, %v208
    %v289 = vsub.f32 %v94, %v217
    %v290 = vsub.f32 %v95, %v226
    %v291 = vsub.f32 %v96, %v235
    %v292 = vsub.f32 %v97, %v244
    %v293 = vsub.f32 %v98, %v253
    %v294 = vsub.f32 %v99, %v262
    %v295 = vsub.f32 %v100, %v127
    %v296 = vsub.f32 %v101, %v136
    %v297 = vsub.f32 %v102, %v145
    %v298 = vsub.f32 %v103, %v154
    %v299 = vsub.f32 %v104, %v163
    %v300 = vsub.f32 %v105, %v172
    %v301 = vsub.f32 %v106, %v181
    %v302 = vsub.f32 %v107, %v190
    %v303 = vsub.f32 %v108, %v199
    %v304 = vsub.f32 %v109, %v208
    %v305 = vsub.f32 %v110, %v217
    %v306 = vsub.f32 %v111, %v226
    %v307 = vsub.f32 %v112, %v235
    %v308 = vsub.f32 %v113, %v244
    %v309 = vsub.f32 %v114, %v253
    %v310 = vsub.f32 %v115, %v262
    %v311 = vmul.f32 %v263, 1.442695
    %v312 = vpow.pop %v311
    %v313 = vmul.f32 %v264, 1.442695
    %v314 = vpow.pop %v313
    %v315 = vmul.f32 %v265, 1.442695
    %v316 = vpow.pop %v315
    %v317 = vmul.f32 %v266, 1.442695
    %v318 = vpow.pop %v317
    %v319 = vmul.f32 %v267, 1.442695
    %v320 = vpow.pop %v319
    %v321 = vmul.f32 %v268, 1.442695
    %v322 = vpow.pop %v321
    %v323 = vmul.f32 %v269, 1.442695
    %v324 = vpow.pop %v323
    %v325 = vmul.f32 %v270, 1.442695
    %v326 = vpow.pop %v325
    %v327 = vmul.f32 %v271, 1.442695
    %v328 = vpow.pop %v327
    %v329 = vmul.f32 %v272, 1.442695
    %v330 = vpow.pop %v329
    %v331 = vmul.f32 %v273, 1.442695
    %v332 = vpow.pop %v331
    %v333 = vmul.f32 %v274, 1.442695
    %v334 = vpow.pop %v333
    %v335 = vmul.f32 %v275, 1.442695
    %v336 = vpow.pop %v335
    %v337 = vmul.f32 %v276, 1.442695
    %v338 = vpow.pop %v337
    %v339 = vmul.f32 %v277, 1.442695
    %v340 = vpow.pop %v339
    %v341 = vmul.f32 %v278, 1.442695
    %v342 = vpow.pop %v341
    %v343 = vmul.f32 %v279, 1.442695
    %v344 = vpow.pop %v343
    %v345 = vmul.f32 %v280, 1.442695
    %v346 = vpow.pop %v345
    %v347 = vmul.f32 %v281, 1.442695
    %v348 = vpow.pop %v347
    %v349 = vmul.f32 %v282, 1.442695
    %v350 = vpow.pop %v349
    %v351 = vmul.f32 %v283, 1.442695
    %v352 = vpow.pop %v351
    %v353 = vmul.f32 %v284, 1.442695
    %v354 = vpow.pop %v353
    %v355 = vmul.f32 %v285, 1.442695
    %v356 = vpow.pop %v355
    %v357 = vmul.f32 %v286, 1.442695
    %v358 = vpow.pop %v357
    %v359 = vmul.f32 %v287, 1.442695
    %v360 = vpow.pop %v359
    %v361 = vmul.f32 %v288, 1.442695
    %v362 = vpow.pop %v361
    %v363 = vmul.f32 %v289, 1.442695
    %v364 = vpow.pop %v363
    %v365 = vmul.f32 %v290, 1.442695
    %v366 = vpow.pop %v365
    %v367 = vmul.f32 %v291, 1.442695
    %v368 = vpow.pop %v367
    %v369 = vmul.f32 %v292, 1.442695
    %v370 = vpow.pop %v369
    %v371 = vmul.f32 %v293, 1.442695
    %v372 = vpow.pop %v371
    %v373 = vmul.f32 %v294, 1.442695
    %v374 = vpow.pop %v373
    %v375 = vmul.f32 %v295, 1.442695
    %v376 = vpow.pop %v375
    %v377 = vmul.f32 %v296, 1.442695
    %v378 = vpow.pop %v377
    %v379 = vmul.f32 %v297, 1.442695
    %v380 = vpow.pop %v379
    %v381 = vmul.f32 %v298, 1.442695
    %v382 = vpow.pop %v381
    %v383 = vmul.f32 %v299, 1.442695
    %v384 = vpow.pop %v383
    %v385 = vmul.f32 %v300, 1.442695
    %v386 = vpow.pop %v385
    %v387 = vmul.f32 %v301, 1.442695
    %v388 = vpow.pop %v387
    %v389 = vmul.f32 %v302, 1.442695
    %v390 = vpow.pop %v389
    %v391 = vmul.f32 %v303, 1.442695
    %v392 = vpow.pop %v391
    %v393 = vmul.f32 %v304, 1.442695
    %v394 = vpow.pop %v393
    %v395 = vmul.f32 %v305, 1.442695
    %v396 = vpow.pop %v395
    %v397 = vmul.f32 %v306, 1.442695
    %v398 = vpow.pop %v397
    %v399 = vmul.f32 %v307, 1.442695
    %v400 = vpow.pop %v399
    %v401 = vmul.f32 %v308, 1.442695
    %v402 = vpow.pop %v401
    %v403 = vmul.f32 %v309, 1.442695
    %v404 = vpow.pop %v403
    %v405 = vmul.f32 %v310, 1.442695
    %v406 = vpow.pop %v405
    %v407 = vadd.f32 %v312, %v344
    %v408 = vsel %vm119, %v376, 0.0
    %v409 = vadd.f32 %v407, %v408
    %v410 = vrot.slane %v409, 4
    %v411 = vadd.f32 %v409, %v410
    %v412 = vrot.slane %v411, 2
    %v413 = vadd.f32 %v411, %v412
    %v414 = vrot.slane %v413, 1
    %v415 = vadd.f32 %v413, %v414
    %v416 = vadd.f32 %v314, %v346
    %v417 = vsel %vm119, %v378, 0.0
    %v418 = vadd.f32 %v416, %v417
    %v419 = vrot.slane %v418, 4
    %v420 = vadd.f32 %v418, %v419
    %v421 = vrot.slane %v420, 2
    %v422 = vadd.f32 %v420, %v421
    %v423 = vrot.slane %v422, 1
    %v424 = vadd.f32 %v422, %v423
    %v425 = vadd.f32 %v316, %v348
    %v426 = vsel %vm119, %v380, 0.0
    %v427 = vadd.f32 %v425, %v426
    %v428 = vrot.slane %v427, 4
    %v429 = vadd.f32 %v427, %v428
    %v430 = vrot.slane %v429, 2
    %v431 = vadd.f32 %v429, %v430
    %v432 = vrot.slane %v431, 1
    %v433 = vadd.f32 %v431, %v432
    %v434 = vadd.f32 %v318, %v350
    %v435 = vsel %vm119, %v382, 0.0
    %v436 = vadd.f32 %v434, %v435
    %v437 = vrot.slane %v436, 4
    %v438 = vadd.f32 %v436, %v437
    %v439 = vrot.slane %v438, 2
    %v440 = vadd.f32 %v438, %v439
    %v441 = vrot.slane %v440, 1
    %v442 = vadd.f32 %v440, %v441
    %v443 = vadd.f32 %v320, %v352
    %v444 = vsel %vm119, %v384, 0.0
    %v445 = vadd.f32 %v443, %v444
    %v446 = vrot.slane %v445, 4
    %v447 = vadd.f32 %v445, %v446
    %v448 = vrot.slane %v447, 2
    %v449 = vadd.f32 %v447, %v448
    %v450 = vrot.slane %v449, 1
    %v451 = vadd.f32 %v449, %v450
    %v452 = vadd.f32 %v322, %v354
    %v453 = vsel %vm119, %v386, 0.0
    %v454 = vadd.f32 %v452, %v453
    %v455 = vrot.slane %v454, 4
    %v456 = vadd.f32 %v454, %v455
    %v457 = vrot.slane %v456, 2
    %v458 = vadd.f32 %v456, %v457
    %v459 = vrot.slane %v458, 1
    %v460 = vadd.f32 %v458, %v459
    %v461 = vadd.f32 %v324, %v356
    %v462 = vsel %vm119, %v388, 0.0
    %v463 = vadd.f32 %v461, %v462
    %v464 = vrot.slane %v463, 4
    %v465 = vadd.f32 %v463, %v464
    %v466 = vrot.slane %v465, 2
    %v467 = vadd.f32 %v465, %v466
    %v468 = vrot.slane %v467, 1
    %v469 = vadd.f32 %v467, %v468
    %v470 = vadd.f32 %v326, %v358
    %v471 = vsel %vm119, %v390, 0.0
    %v472 = vadd.f32 %v470, %v471
    %v473 = vrot.slane %v472, 4
    %v474 = vadd.f32 %v472, %v473
    %v475 = vrot.slane %v474, 2
    %v476 = vadd.f32 %v474, %v475
    %v477 = vrot.slane %v476, 1
    %v478 = vadd.f32 %v476, %v477
    %v479 = vadd.f32 %v328, %v360
    %v480 = vsel %vm119, %v392, 0.0
    %v481 = vadd.f32 %v479, %v480
    %v482 = vrot.slane %v481, 4
    %v483 = vadd.f32 %v481, %v482
    %v484 = vrot.slane %v483, 2
    %v485 = vadd.f32 %v483, %v484
    %v486 = vrot.slane %v485, 1
    %v487 = vadd.f32 %v485, %v486
    %v488 = vadd.f32 %v330, %v362
    %v489 = vsel %vm119, %v394, 0.0
    %v490 = vadd.f32 %v488, %v489
    %v491 = vrot.slane %v490, 4
    %v492 = vadd.f32 %v490, %v491
    %v493 = vrot.slane %v492, 2
    %v494 = vadd.f32 %v492, %v493
    %v495 = vrot.slane %v494, 1
    %v496 = vadd.f32 %v494, %v495
    %v497 = vadd.f32 %v332, %v364
    %v498 = vsel %vm119, %v396, 0.0
    %v499 = vadd.f32 %v497, %v498
    %v500 = vrot.slane %v499, 4
    %v501 = vadd.f32 %v499, %v500
    %v502 = vrot.slane %v501, 2
    %v503 = vadd.f32 %v501, %v502
    %v504 = vrot.slane %v503, 1
    %v505 = vadd.f32 %v503, %v504
    %v506 = vadd.f32 %v334, %v366
    %v507 = vsel %vm119, %v398, 0.0
    %v508 = vadd.f32 %v506, %v507
    %v509 = vrot.slane %v508, 4
    %v510 = vadd.f32 %v508, %v509
    %v511 = vrot.slane %v510, 2
    %v512 = vadd.f32 %v510, %v511
    %v513 = vrot.slane %v512, 1
    %v514 = vadd.f32 %v512, %v513
    %v515 = vadd.f32 %v336, %v368
    %v516 = vsel %vm119, %v400, 0.0
    %v517 = vadd.f32 %v515, %v516
    %v518 = vrot.slane %v517, 4
    %v519 = vadd.f32 %v517, %v518
    %v520 = vrot.slane %v519, 2
    %v521 = vadd.f32 %v519, %v520
    %v522 = vrot.slane %v521, 1
    %v523 = vadd.f32 %v521, %v522
    %v524 = vadd.f32 %v338, %v370
    %v525 = vsel %vm119, %v402, 0.0
    %v526 = vadd.f32 %v524, %v525
    %v527 = vrot.slane %v526, 4
    %v528 = vadd.f32 %v526, %v527
    %v529 = vrot.slane %v528, 2
    %v530 = vadd.f32 %v528, %v529
    %v531 = vrot.slane %v530, 1
    %v532 = vadd.f32 %v530, %v531
    %v533 = vadd.f32 %v340, %v372
    %v534 = vsel %vm119, %v404, 0.0
    %v535 = vadd.f32 %v533, %v534
    %v536 = vrot.slane %v535, 4
    %v537 = vadd.f32 %v535, %v536
    %v538 = vrot.slane %v537, 2
    %v539 = vadd.f32 %v537, %v538
    %v540 = vrot.slane %v539, 1
    %v541 = vadd.f32 %v539, %v540
    %v542 = vadd.f32 %v342, %v374
    %v543 = vsel %vm119, %v406, 0.0
    %v544 = vadd.f32 %v542, %v543
    %v545 = vrot.slane %v544, 4
    %v546 = vadd.f32 %v544, %v545
    %v547 = vrot.slane %v546, 2
    %v548 = vadd.f32 %v546, %v547
    %v549 = vrot.slane %v548, 1
    %v550 = vadd.f32 %v548, %v549
    %v551 = vlog2.pop %v415
    %v552 = vmul.f32 %v551, 0.6931472
    %v553 = vlog2.pop %v424
    %v554 = vmul.f32 %v553, 0.6931472
    %v555 = vlog2.pop %v433
    %v556 = vmul.f32 %v555, 0.6931472
    %v557 = vlog2.pop %v442
    %v558 = vmul.f32 %v557, 0.6931472
    %v559 = vlog2.pop %v451
    %v560 = vmul.f32 %v559, 0.6931472
    %v561 = vlog2.pop %v460
    %v562 = vmul.f32 %v561, 0.6931472
    %v563 = vlog2.pop %v469
    %v564 = vmul.f32 %v563, 0.6931472
    %v565 = vlog2.pop %v478
    %v566 = vmul.f32 %v565, 0.6931472
    %v567 = vlog2.pop %v487
    %v568 = vmul.f32 %v567, 0.6931472
    %v569 = vlog2.pop %v496
    %v570 = vmul.f32 %v569, 0.6931472
    %v571 = vlog2.pop %v505
    %v572 = vmul.f32 %v571, 0.6931472
    %v573 = vlog2.pop %v514
    %v574 = vmul.f32 %v573, 0.6931472
    %v575 = vlog2.pop %v523
    %v576 = vmul.f32 %v575, 0.6931472
    %v577 = vlog2.pop %v532
    %v578 = vmul.f32 %v577, 0.6931472
    %v579 = vlog2.pop %v541
    %v580 = vmul.f32 %v579, 0.6931472
    %v581 = vlog2.pop %v550
    %v582 = vmul.f32 %v581, 0.6931472
    %v583 = vadd.f32 %v127, %v552
    %v584 = vadd.f32 %v136, %v554
    %v585 = vadd.f32 %v145, %v556
    %v586 = vadd.f32 %v154, %v558
    %v587 = vadd.f32 %v163, %v560
    %v588 = vadd.f32 %v172, %v562
    %v589 = vadd.f32 %v181, %v564
    %v590 = vadd.f32 %v190, %v566
    %v591 = vadd.f32 %v199, %v568
    %v592 = vadd.f32 %v208, %v570
    %v593 = vadd.f32 %v217, %v572
    %v594 = vadd.f32 %v226, %v574
    %v595 = vadd.f32 %v235, %v576
    %v596 = vadd.f32 %v244, %v578
    %v597 = vadd.f32 %v253, %v580
    %v598 = vadd.f32 %v262, %v582
    %v599 = vlaneseq
    %v600 = vshrl.u32 %v599, 7
    %v601 = vadd.s32 %v600, 8
    %v602 = vadd.s32 %v600, 16
    %v603 = vlaneseq
    %v604 = vshrl.u32 %v603, 7
    %v605 = vsub.s32 0, %v604
    %v606 = vrot.slane %v116, %v605
    %v607 = vlaneseq
    %v608 = vshrl.u32 %v607, 7
    %v609 = vsub.s32 1, %v608
    %v610 = vrot.slane %v116, %v609
    %v611 = vlaneseq
    %v612 = vshrl.u32 %v611, 7
    %v613 = vsub.s32 2, %v612
    %v614 = vrot.slane %v116, %v613
    %v615 = vlaneseq
    %v616 = vshrl.u32 %v615, 7
    %v617 = vsub.s32 3, %v616
    %v618 = vrot.slane %v116, %v617
    %v619 = vlaneseq
    %v620 = vshrl.u32 %v619, 7
    %v621 = vsub.s32 4, %v620
    %v622 = vrot.slane %v116, %v621
    %v623 = vlaneseq
    %v624 = vshrl.u32 %v623, 7
    %v625 = vsub.s32 5, %v624
    %v626 = vrot.slane %v116, %v625
    %v627 = vlaneseq
    %v628 = vshrl.u32 %v627, 7
    %v629 = vsub.s32 6, %v628
    %v630 = vrot.slane %v116, %v629
    %v631 = vlaneseq
    %v632 = vshrl.u32 %v631, 7
    %v633 = vsub.s32 7, %v632
    %v634 = vrot.slane %v116, %v633
    %v635 = vlaneseq
    %v636 = vshrl.u32 %v635, 7
    %v637 = vsub.s32 0, %v636
    %v638 = vrot.slane %v117, %v637
    %v639 = vlaneseq
    %v640 = vshrl.u32 %v639, 7
    %v641 = vsub.s32 1, %v640
    %v642 = vrot.slane %v117, %v641
    %v643 = vlaneseq
    %v644 = vshrl.u32 %v643, 7
    %v645 = vsub.s32 2, %v644
    %v646 = vrot.slane %v117, %v645
    %v647 = vlaneseq
    %v648 = vshrl.u32 %v647, 7
    %v649 = vsub.s32 3, %v648
    %v650 = vrot.slane %v117, %v649
    %v651 = vlaneseq
    %v652 = vshrl.u32 %v651, 7
    %v653 = vsub.s32 4, %v652
    %v654 = vrot.slane %v117, %v653
    %v655 = vlaneseq
    %v656 = vshrl.u32 %v655, 7
    %v657 = vsub.s32 5, %v656
    %v658 = vrot.slane %v117, %v657
    %v659 = vlaneseq
    %v660 = vshrl.u32 %v659, 7
    %v661 = vsub.s32 6, %v660
    %v662 = vrot.slane %v117, %v661
    %v663 = vlaneseq
    %v664 = vshrl.u32 %v663, 7
    %v665 = vsub.s32 7, %v664
    %v666 = vrot.slane %v117, %v665
    %vm667 = vcmp.eq.s32.totalorder %v600, %v606
    %vm668 = vcmp.eq.s32.totalorder %v600, %v610
    %vm669 = vcmp.eq.s32.totalorder %v600, %v614
    %vm670 = vcmp.eq.s32.totalorder %v600, %v618
    %vm671 = vcmp.eq.s32.totalorder %v600, %v622
    %vm672 = vcmp.eq.s32.totalorder %v600, %v626
    %vm673 = vcmp.eq.s32.totalorder %v600, %v630
    %vm674 = vcmp.eq.s32.totalorder %v600, %v634
    %vm675 = vcmp.eq.s32.totalorder %v600, %v638
    %vm676 = vcmp.eq.s32.totalorder %v600, %v642
    %vm677 = vcmp.eq.s32.totalorder %v600, %v646
    %vm678 = vcmp.eq.s32.totalorder %v600, %v650
    %vm679 = vcmp.eq.s32.totalorder %v600, %v654
    %vm680 = vcmp.eq.s32.totalorder %v600, %v658
    %vm681 = vcmp.eq.s32.totalorder %v600, %v662
    %vm682 = vcmp.eq.s32.totalorder %v600, %v666
    %vm683 = vcmp.eq.s32.totalorder %v601, %v606
    %vm684 = vcmp.eq.s32.totalorder %v601, %v610
    %vm685 = vcmp.eq.s32.totalorder %v601, %v614
    %vm686 = vcmp.eq.s32.totalorder %v601, %v618
    %vm687 = vcmp.eq.s32.totalorder %v601, %v622
    %vm688 = vcmp.eq.s32.totalorder %v601, %v626
    %vm689 = vcmp.eq.s32.totalorder %v601, %v630
    %vm690 = vcmp.eq.s32.totalorder %v601, %v634
    %vm691 = vcmp.eq.s32.totalorder %v601, %v638
    %vm692 = vcmp.eq.s32.totalorder %v601, %v642
    %vm693 = vcmp.eq.s32.totalorder %v601, %v646
    %vm694 = vcmp.eq.s32.totalorder %v601, %v650
    %vm695 = vcmp.eq.s32.totalorder %v601, %v654
    %vm696 = vcmp.eq.s32.totalorder %v601, %v658
    %vm697 = vcmp.eq.s32.totalorder %v601, %v662
    %vm698 = vcmp.eq.s32.totalorder %v601, %v666
    %vm699 = vcmp.eq.s32.totalorder %v602, %v606
    %vm700 = vcmp.eq.s32.totalorder %v602, %v610
    %vm701 = vcmp.eq.s32.totalorder %v602, %v614
    %vm702 = vcmp.eq.s32.totalorder %v602, %v618
    %vm703 = vcmp.eq.s32.totalorder %v602, %v622
    %vm704 = vcmp.eq.s32.totalorder %v602, %v626
    %vm705 = vcmp.eq.s32.totalorder %v602, %v630
    %vm706 = vcmp.eq.s32.totalorder %v602, %v634
    %vm707 = vcmp.eq.s32.totalorder %v602, %v638
    %vm708 = vcmp.eq.s32.totalorder %v602, %v642
    %vm709 = vcmp.eq.s32.totalorder %v602, %v646
    %vm710 = vcmp.eq.s32.totalorder %v602, %v650
    %vm711 = vcmp.eq.s32.totalorder %v602, %v654
    %vm712 = vcmp.eq.s32.totalorder %v602, %v658
    %vm713 = vcmp.eq.s32.totalorder %v602, %v662
    %vm714 = vcmp.eq.s32.totalorder %v602, %v666
    %v715 = vsel %vm667, %v68, 0.0
    %v716 = vsel %vm668, %v69, 0.0
    %v717 = vsel %vm669, %v70, 0.0
    %v718 = vsel %vm670, %v71, 0.0
    %v719 = vsel %vm671, %v72, 0.0
    %v720 = vsel %vm672, %v73, 0.0
    %v721 = vsel %vm673, %v74, 0.0
    %v722 = vsel %vm674, %v75, 0.0
    %v723 = vsel %vm675, %v76, 0.0
    %v724 = vsel %vm676, %v77, 0.0
    %v725 = vsel %vm677, %v78, 0.0
    %v726 = vsel %vm678, %v79, 0.0
    %v727 = vsel %vm679, %v80, 0.0
    %v728 = vsel %vm680, %v81, 0.0
    %v729 = vsel %vm681, %v82, 0.0
    %v730 = vsel %vm682, %v83, 0.0
    %v731 = vsel %vm683, %v84, 0.0
    %v732 = vsel %vm684, %v85, 0.0
    %v733 = vsel %vm685, %v86, 0.0
    %v734 = vsel %vm686, %v87, 0.0
    %v735 = vsel %vm687, %v88, 0.0
    %v736 = vsel %vm688, %v89, 0.0
    %v737 = vsel %vm689, %v90, 0.0
    %v738 = vsel %vm690, %v91, 0.0
    %v739 = vsel %vm691, %v92, 0.0
    %v740 = vsel %vm692, %v93, 0.0
    %v741 = vsel %vm693, %v94, 0.0
    %v742 = vsel %vm694, %v95, 0.0
    %v743 = vsel %vm695, %v96, 0.0
    %v744 = vsel %vm696, %v97, 0.0
    %v745 = vsel %vm697, %v98, 0.0
    %v746 = vsel %vm698, %v99, 0.0
    %v747 = vsel %vm699, %v100, 0.0
    %v748 = vsel %vm700, %v101, 0.0
    %v749 = vsel %vm701, %v102, 0.0
    %v750 = vsel %vm702, %v103, 0.0
    %v751 = vsel %vm703, %v104, 0.0
    %v752 = vsel %vm704, %v105, 0.0
    %v753 = vsel %vm705, %v106, 0.0
    %v754 = vsel %vm706, %v107, 0.0
    %v755 = vsel %vm707, %v108, 0.0
    %v756 = vsel %vm708, %v109, 0.0
    %v757 = vsel %vm709, %v110, 0.0
    %v758 = vsel %vm710, %v111, 0.0
    %v759 = vsel %vm711, %v112, 0.0
    %v760 = vsel %vm712, %v113, 0.0
    %v761 = vsel %vm713, %v114, 0.0
    %v762 = vsel %vm714, %v115, 0.0
    %v763 = vadd.f32 %v715, %v731
    %v764 = vsel %vm119, %v747, 0.0
    %v765 = vadd.f32 %v763, %v764
    %v766 = vrot.slane %v765, 4
    %v767 = vadd.f32 %v765, %v766
    %v768 = vrot.slane %v767, 2
    %v769 = vadd.f32 %v767, %v768
    %v770 = vrot.slane %v769, 1
    %v771 = vadd.f32 %v769, %v770
    %v772 = vadd.f32 %v716, %v732
    %v773 = vsel %vm119, %v748, 0.0
    %v774 = vadd.f32 %v772, %v773
    %v775 = vrot.slane %v774, 4
    %v776 = vadd.f32 %v774, %v775
    %v777 = vrot.slane %v776, 2
    %v778 = vadd.f32 %v776, %v777
    %v779 = vrot.slane %v778, 1
    %v780 = vadd.f32 %v778, %v779
    %v781 = vadd.f32 %v717, %v733
    %v782 = vsel %vm119, %v749, 0.0
    %v783 = vadd.f32 %v781, %v782
    %v784 = vrot.slane %v783, 4
    %v785 = vadd.f32 %v783, %v784
    %v786 = vrot.slane %v785, 2
    %v787 = vadd.f32 %v785, %v786
    %v788 = vrot.slane %v787, 1
    %v789 = vadd.f32 %v787, %v788
    %v790 = vadd.f32 %v718, %v734
    %v791 = vsel %vm119, %v750, 0.0
    %v792 = vadd.f32 %v790, %v791
    %v793 = vrot.slane %v792, 4
    %v794 = vadd.f32 %v792, %v793
    %v795 = vrot.slane %v794, 2
    %v796 = vadd.f32 %v794, %v795
    %v797 = vrot.slane %v796, 1
    %v798 = vadd.f32 %v796, %v797
    %v799 = vadd.f32 %v719, %v735
    %v800 = vsel %vm119, %v751, 0.0
    %v801 = vadd.f32 %v799, %v800
    %v802 = vrot.slane %v801, 4
    %v803 = vadd.f32 %v801, %v802
    %v804 = vrot.slane %v803, 2
    %v805 = vadd.f32 %v803, %v804
    %v806 = vrot.slane %v805, 1
    %v807 = vadd.f32 %v805, %v806
    %v808 = vadd.f32 %v720, %v736
    %v809 = vsel %vm119, %v752, 0.0
    %v810 = vadd.f32 %v808, %v809
    %v811 = vrot.slane %v810, 4
    %v812 = vadd.f32 %v810, %v811
    %v813 = vrot.slane %v812, 2
    %v814 = vadd.f32 %v812, %v813
    %v815 = vrot.slane %v814, 1
    %v816 = vadd.f32 %v814, %v815
    %v817 = vadd.f32 %v721, %v737
    %v818 = vsel %vm119, %v753, 0.0
    %v819 = vadd.f32 %v817, %v818
    %v820 = vrot.slane %v819, 4
    %v821 = vadd.f32 %v819, %v820
    %v822 = vrot.slane %v821, 2
    %v823 = vadd.f32 %v821, %v822
    %v824 = vrot.slane %v823, 1
    %v825 = vadd.f32 %v823, %v824
    %v826 = vadd.f32 %v722, %v738
    %v827 = vsel %vm119, %v754, 0.0
    %v828 = vadd.f32 %v826, %v827
    %v829 = vrot.slane %v828, 4
    %v830 = vadd.f32 %v828, %v829
    %v831 = vrot.slane %v830, 2
    %v832 = vadd.f32 %v830, %v831
    %v833 = vrot.slane %v832, 1
    %v834 = vadd.f32 %v832, %v833
    %v835 = vadd.f32 %v723, %v739
    %v836 = vsel %vm119, %v755, 0.0
    %v837 = vadd.f32 %v835, %v836
    %v838 = vrot.slane %v837, 4
    %v839 = vadd.f32 %v837, %v838
    %v840 = vrot.slane %v839, 2
    %v841 = vadd.f32 %v839, %v840
    %v842 = vrot.slane %v841, 1
    %v843 = vadd.f32 %v841, %v842
    %v844 = vadd.f32 %v724, %v740
    %v845 = vsel %vm119, %v756, 0.0
    %v846 = vadd.f32 %v844, %v845
    %v847 = vrot.slane %v846, 4
    %v848 = vadd.f32 %v846, %v847
    %v849 = vrot.slane %v848, 2
    %v850 = vadd.f32 %v848, %v849
    %v851 = vrot.slane %v850, 1
    %v852 = vadd.f32 %v850, %v851
    %v853 = vadd.f32 %v725, %v741
    %v854 = vsel %vm119, %v757, 0.0
    %v855 = vadd.f32 %v853, %v854
    %v856 = vrot.slane %v855, 4
    %v857 = vadd.f32 %v855, %v856
    %v858 = vrot.slane %v857, 2
    %v859 = vadd.f32 %v857, %v858
    %v860 = vrot.slane %v859, 1
    %v861 = vadd.f32 %v859, %v860
    %v862 = vadd.f32 %v726, %v742
    %v863 = vsel %vm119, %v758, 0.0
    %v864 = vadd.f32 %v862, %v863
    %v865 = vrot.slane %v864, 4
    %v866 = vadd.f32 %v864, %v865
    %v867 = vrot.slane %v866, 2
    %v868 = vadd.f32 %v866, %v867
    %v869 = vrot.slane %v868, 1
    %v870 = vadd.f32 %v868, %v869
    %v871 = vadd.f32 %v727, %v743
    %v872 = vsel %vm119, %v759, 0.0
    %v873 = vadd.f32 %v871, %v872
    %v874 = vrot.slane %v873, 4
    %v875 = vadd.f32 %v873, %v874
    %v876 = vrot.slane %v875, 2
    %v877 = vadd.f32 %v875, %v876
    %v878 = vrot.slane %v877, 1
    %v879 = vadd.f32 %v877, %v878
    %v880 = vadd.f32 %v728, %v744
    %v881 = vsel %vm119, %v760, 0.0
    %v882 = vadd.f32 %v880, %v881
    %v883 = vrot.slane %v882, 4
    %v884 = vadd.f32 %v882, %v883
    %v885 = vrot.slane %v884, 2
    %v886 = vadd.f32 %v884, %v885
    %v887 = vrot.slane %v886, 1
    %v888 = vadd.f32 %v886, %v887
    %v889 = vadd.f32 %v729, %v745
    %v890 = vsel %vm119, %v761, 0.0
    %v891 = vadd.f32 %v889, %v890
    %v892 = vrot.slane %v891, 4
    %v893 = vadd.f32 %v891, %v892
    %v894 = vrot.slane %v893, 2
    %v895 = vadd.f32 %v893, %v894
    %v896 = vrot.slane %v895, 1
    %v897 = vadd.f32 %v895, %v896
    %v898 = vadd.f32 %v730, %v746
    %v899 = vsel %vm119, %v762, 0.0
    %v900 = vadd.f32 %v898, %v899
    %v901 = vrot.slane %v900, 4
    %v902 = vadd.f32 %v900, %v901
    %v903 = vrot.slane %v902, 2
    %v904 = vadd.f32 %v902, %v903
    %v905 = vrot.slane %v904, 1
    %v906 = vadd.f32 %v904, %v905
    %v907 = vsub.f32 %v583, %v771
    %v908 = vsub.f32 %v584, %v780
    %v909 = vsub.f32 %v585, %v789
    %v910 = vsub.f32 %v586, %v798
    %v911 = vsub.f32 %v587, %v807
    %v912 = vsub.f32 %v588, %v816
    %v913 = vsub.f32 %v589, %v825
    %v914 = vsub.f32 %v590, %v834
    %v915 = vsub.f32 %v591, %v843
    %v916 = vsub.f32 %v592, %v852
    %v917 = vsub.f32 %v593, %v861
    %v918 = vsub.f32 %v594, %v870
    %v919 = vsub.f32 %v595, %v879
    %v920 = vsub.f32 %v596, %v888
    %v921 = vsub.f32 %v597, %v897
    %v922 = vsub.f32 %v598, %v906
    %s923 = sadd.s32 0, 0
    %s924 = smul.u32 %s923, 2048
    %v925 = vlaneseq
    %v926 = vand.u32 %v925, 127
    %v927 = vadd.s32 %v926, 128
    %v928 = vadd.s32 %v926, 256
    %v929 = vadd.s32 %v926, 384
    %v930 = vadd.s32 %v926, 512
    %v931 = vadd.s32 %v926, 640
    %v932 = vadd.s32 %v926, 768
    %v933 = vadd.s32 %v926, 896
    %v934 = vadd.s32 %v926, 1024
    %v935 = vadd.s32 %v926, 1152
    %v936 = vadd.s32 %v926, 1280
    %v937 = vadd.s32 %v926, 1408
    %v938 = vadd.s32 %v926, 1536
    %v939 = vadd.s32 %v926, 1664
    %v940 = vadd.s32 %v926, 1792
    %v941 = vadd.s32 %v926, 1920
    %v942 = vstv %s924
    %v943 = vadd.s32 %v942, %v926
    %v944 = vadd.s32 %v942, %v927
    %v945 = vadd.s32 %v942, %v928
    %v946 = vadd.s32 %v942, %v929
    %v947 = vadd.s32 %v942, %v930
    %v948 = vadd.s32 %v942, %v931
    %v949 = vadd.s32 %v942, %v932
    %v950 = vadd.s32 %v942, %v933
    %v951 = vadd.s32 %v942, %v934
    %v952 = vadd.s32 %v942, %v935
    %v953 = vadd.s32 %v942, %v936
    %v954 = vadd.s32 %v942, %v937
    %v955 = vadd.s32 %v942, %v938
    %v956 = vadd.s32 %v942, %v939
    %v957 = vadd.s32 %v942, %v940
    %v958 = vadd.s32 %v942, %v941
    %vm959 = vcmp.lt.s32.totalorder %v943, 512
    %vm960 = vcmp.lt.s32.totalorder %v944, 512
    %vm961 = vcmp.lt.s32.totalorder %v945, 512
    %vm962 = vcmp.lt.s32.totalorder %v946, 512
    %vm963 = vcmp.lt.s32.totalorder %v947, 512
    %vm964 = vcmp.lt.s32.totalorder %v948, 512
    %vm965 = vcmp.lt.s32.totalorder %v949, 512
    %vm966 = vcmp.lt.s32.totalorder %v950, 512
    %vm967 = vcmp.lt.s32.totalorder %v951, 512
    %vm968 = vcmp.lt.s32.totalorder %v952, 512
    %vm969 = vcmp.lt.s32.totalorder %v953, 512
    %vm970 = vcmp.lt.s32.totalorder %v954, 512
    %vm971 = vcmp.lt.s32.totalorder %v955, 512
    %vm972 = vcmp.lt.s32.totalorder %v956, 512
    %vm973 = vcmp.lt.s32.totalorder %v957, 512
    %vm974 = vcmp.lt.s32.totalorder %v958, 512
    %v975 = vsel %vm959, %v907, 0.0
    %v976 = vsel %vm960, %v908, 0.0
    %v977 = vsel %vm961, %v909, 0.0
    %v978 = vsel %vm962, %v910, 0.0
    %v979 = vsel %vm963, %v911, 0.0
    %v980 = vsel %vm964, %v912, 0.0
    %v981 = vsel %vm965, %v913, 0.0
    %v982 = vsel %vm966, %v914, 0.0
    %v983 = vsel %vm967, %v915, 0.0
    %v984 = vsel %vm968, %v916, 0.0
    %v985 = vsel %vm969, %v917, 0.0
    %v986 = vsel %vm970, %v918, 0.0
    %v987 = vsel %vm971, %v919, 0.0
    %v988 = vsel %vm972, %v920, 0.0
    %v989 = vsel %vm973, %v921, 0.0
    %v990 = vsel %vm974, %v922, 0.0
    %v991 = vld [vmem:[#allocation2] sm:$0xff]
    %v992 = vld [vmem:[#allocation2 + $0x8] sm:$0xff]
    %v1009 = vcombine.low %v975, %v976
    %v1010 = vcombine.low %v977, %v978
    %v1011 = vcombine.low %v979, %v980
    %v1012 = vcombine.low %v981, %v982
    %v1014 = vunpack.c.l.s4 1966171168
    %v1015 = vunpack.c.0.s8 %v1014
    %v1016 = vlaneseq
    %v1017 = vshrl.u32 %v1016, 7
    %v1018 = vsub.s32 %v1015, %v1017
    %v1019 = vrot.slane %v1009, %v1018
    %v1021 = vunpack.c.l.s4 1966171168
    %v1022 = vunpack.c.0.s8 %v1021
    %v1023 = vlaneseq
    %v1024 = vshrl.u32 %v1023, 7
    %v1025 = vsub.s32 %v1022, %v1024
    %v1026 = vrot.slane %v1010, %v1025
    %v1028 = vunpack.c.l.s4 1966171168
    %v1029 = vunpack.c.0.s8 %v1028
    %v1030 = vlaneseq
    %v1031 = vshrl.u32 %v1030, 7
    %v1032 = vsub.s32 %v1029, %v1031
    %v1033 = vrot.slane %v1011, %v1032
    %v1035 = vunpack.c.l.s4 1966171168
    %v1036 = vunpack.c.0.s8 %v1035
    %v1037 = vlaneseq
    %v1038 = vshrl.u32 %v1037, 7
    %v1039 = vsub.s32 %v1036, %v1038
    %v1040 = vrot.slane %v1012, %v1039
    %v1041 = vcombine.low %v1019, %v1026
    %v1042 = vcombine.low %v1033, %v1040
    %v1044 = vunpack.c.l.s4 1966171168
    %v1045 = vunpack.c.0.s8 %v1044
    %v1046 = vlaneseq
    %v1047 = vshrl.u32 %v1046, 7
    %v1048 = vsub.s32 %v1045, %v1047
    %v1049 = vrot.slane %v1041, %v1048
    %v1051 = vunpack.c.l.s4 1966171168
    %v1052 = vunpack.c.0.s8 %v1051
    %v1053 = vlaneseq
    %v1054 = vshrl.u32 %v1053, 7
    %v1055 = vsub.s32 %v1052, %v1054
    %v1056 = vrot.slane %v1042, %v1055
    %v1057 = vcombine.low %v1049, %v1056
    %v1058 = vcombine.low %v983, %v984
    %v1059 = vcombine.low %v985, %v986
    %v1060 = vcombine.low %v987, %v988
    %v1061 = vcombine.low %v989, %v990
    %v1063 = vunpack.c.l.s4 1966171168
    %v1064 = vunpack.c.0.s8 %v1063
    %v1065 = vlaneseq
    %v1066 = vshrl.u32 %v1065, 7
    %v1067 = vsub.s32 %v1064, %v1066
    %v1068 = vrot.slane %v1058, %v1067
    %v1070 = vunpack.c.l.s4 1966171168
    %v1071 = vunpack.c.0.s8 %v1070
    %v1072 = vlaneseq
    %v1073 = vshrl.u32 %v1072, 7
    %v1074 = vsub.s32 %v1071, %v1073
    %v1075 = vrot.slane %v1059, %v1074
    %v1077 = vunpack.c.l.s4 1966171168
    %v1078 = vunpack.c.0.s8 %v1077
    %v1079 = vlaneseq
    %v1080 = vshrl.u32 %v1079, 7
    %v1081 = vsub.s32 %v1078, %v1080
    %v1082 = vrot.slane %v1060, %v1081
    %v1084 = vunpack.c.l.s4 1966171168
    %v1085 = vunpack.c.0.s8 %v1084
    %v1086 = vlaneseq
    %v1087 = vshrl.u32 %v1086, 7
    %v1088 = vsub.s32 %v1085, %v1087
    %v1089 = vrot.slane %v1061, %v1088
    %v1090 = vcombine.low %v1068, %v1075
    %v1091 = vcombine.low %v1082, %v1089
    %v1093 = vunpack.c.l.s4 1966171168
    %v1094 = vunpack.c.0.s8 %v1093
    %v1095 = vlaneseq
    %v1096 = vshrl.u32 %v1095, 7
    %v1097 = vsub.s32 %v1094, %v1096
    %v1098 = vrot.slane %v1090, %v1097
    %v1100 = vunpack.c.l.s4 1966171168
    %v1101 = vunpack.c.0.s8 %v1100
    %v1102 = vlaneseq
    %v1103 = vshrl.u32 %v1102, 7
    %v1104 = vsub.s32 %v1101, %v1103
    %v1105 = vrot.slane %v1091, %v1104
    %v1106 = vcombine.low %v1098, %v1105
    %v1109 = vadd.f32 %v991, %v1057
    %v1110 = vadd.f32 %v992, %v1106
    %1111 = vst [vmem:[#allocation2] sm:$0xff] %v1109
    %1112 = vst [vmem:[#allocation2 + $0x8] sm:$0xff] %v1110
    // Predicated region
    $region22: #{tpu_custom_call.1} parent=1 // pred_check
      %p1113 = pneg %p62
    $region23: #{tpu_custom_call.1} parent=1 // pred_check_branch
      %1115 = sbr.rel (%p1113) target = $region25
    $region24: #{tpu_custom_call.1} parent=1 // pred_region
      %v1116 = vld [vmem:[#allocation2] sm:$0xff]
      %v1117 = vld [vmem:[#allocation2 + $0x8] sm:$0xff]
      %v1120 = vlaneseq
      %v1121 = vshrl.u32 %v1120, 7
      %v1122 = vsub.s32 0, %v1121
      %v1123 = vrot.slane %v1116, %v1122
      %v1124 = vlaneseq
      %v1125 = vshrl.u32 %v1124, 7
      %v1126 = vsub.s32 1, %v1125
      %v1127 = vrot.slane %v1116, %v1126
      %v1128 = vlaneseq
      %v1129 = vshrl.u32 %v1128, 7
      %v1130 = vsub.s32 2, %v1129
      %v1131 = vrot.slane %v1116, %v1130
      %v1132 = vlaneseq
      %v1133 = vshrl.u32 %v1132, 7
      %v1134 = vsub.s32 3, %v1133
      %v1135 = vrot.slane %v1116, %v1134
      %v1136 = vlaneseq
      %v1137 = vshrl.u32 %v1136, 7
      %v1138 = vsub.s32 4, %v1137
      %v1139 = vrot.slane %v1116, %v1138
      %v1140 = vlaneseq
      %v1141 = vshrl.u32 %v1140, 7
      %v1142 = vsub.s32 5, %v1141
      %v1143 = vrot.slane %v1116, %v1142
      %v1144 = vlaneseq
      %v1145 = vshrl.u32 %v1144, 7
      %v1146 = vsub.s32 6, %v1145
      %v1147 = vrot.slane %v1116, %v1146
      %v1148 = vlaneseq
      %v1149 = vshrl.u32 %v1148, 7
      %v1150 = vsub.s32 7, %v1149
      %v1151 = vrot.slane %v1116, %v1150
      %v1152 = vlaneseq
      %v1153 = vshrl.u32 %v1152, 7
      %v1154 = vsub.s32 0, %v1153
      %v1155 = vrot.slane %v1117, %v1154
      %v1156 = vlaneseq
      %v1157 = vshrl.u32 %v1156, 7
      %v1158 = vsub.s32 1, %v1157
      %v1159 = vrot.slane %v1117, %v1158
      %v1160 = vlaneseq
      %v1161 = vshrl.u32 %v1160, 7
      %v1162 = vsub.s32 2, %v1161
      %v1163 = vrot.slane %v1117, %v1162
      %v1164 = vlaneseq
      %v1165 = vshrl.u32 %v1164, 7
      %v1166 = vsub.s32 3, %v1165
      %v1167 = vrot.slane %v1117, %v1166
      %v1168 = vlaneseq
      %v1169 = vshrl.u32 %v1168, 7
      %v1170 = vsub.s32 4, %v1169
      %v1171 = vrot.slane %v1117, %v1170
      %v1172 = vlaneseq
      %v1173 = vshrl.u32 %v1172, 7
      %v1174 = vsub.s32 5, %v1173
      %v1175 = vrot.slane %v1117, %v1174
      %v1176 = vlaneseq
      %v1177 = vshrl.u32 %v1176, 7
      %v1178 = vsub.s32 6, %v1177
      %v1179 = vrot.slane %v1117, %v1178
      %v1180 = vlaneseq
      %v1181 = vshrl.u32 %v1180, 7
      %v1182 = vsub.s32 7, %v1181
      %v1183 = vrot.slane %v1117, %v1182
      %vm1200 = vcmask 1040384
      %v1201 = vsel %vm1200, %v1123, 0.0
      %v1202 = vsel %vm1200, %v1127, 0.0
      %v1203 = vadd.f32 %v1201, %v1202
      %v1204 = vsel %vm1200, %v1131, 0.0
      %v1205 = vadd.f32 %v1203, %v1204
      %v1206 = vsel %vm1200, %v1135, 0.0
      %v1207 = vadd.f32 %v1205, %v1206
      %v1208 = vsel %vm1200, %v1139, 0.0
      %v1209 = vadd.f32 %v1207, %v1208
      %v1210 = vsel %vm1200, %v1143, 0.0
      %v1211 = vadd.f32 %v1209, %v1210
      %v1212 = vsel %vm1200, %v1147, 0.0
      %v1213 = vadd.f32 %v1211, %v1212
      %v1214 = vsel %vm1200, %v1151, 0.0
      %v1215 = vadd.f32 %v1213, %v1214
      %v1216 = vsel %vm1200, %v1155, 0.0
      %v1217 = vadd.f32 %v1215, %v1216
      %v1218 = vsel %vm1200, %v1159, 0.0
      %v1219 = vadd.f32 %v1217, %v1218
      %v1220 = vsel %vm1200, %v1163, 0.0
      %v1221 = vadd.f32 %v1219, %v1220
      %v1222 = vsel %vm1200, %v1167, 0.0
      %v1223 = vadd.f32 %v1221, %v1222
      %v1224 = vsel %vm1200, %v1171, 0.0
      %v1225 = vadd.f32 %v1223, %v1224
      %v1226 = vsel %vm1200, %v1175, 0.0
      %v1227 = vadd.f32 %v1225, %v1226
      %v1228 = vsel %vm1200, %v1179, 0.0
      %v1229 = vadd.f32 %v1227, %v1228
      %v1230 = vsel %vm1200, %v1183, 0.0
      %v1231 = vadd.f32 %v1229, %v1230
      %1232 = vadd.xlane.f32.xlu0 %v1231
      %v1233 = vpop.xlane.xlu0 %1232
      %v1234 = vrot.slane %v1233, 4
      %v1235 = vadd.f32 %v1233, %v1234
      %v1236 = vrot.slane %v1235, 2
      %v1237 = vadd.f32 %v1235, %v1236
      %v1238 = vrot.slane %v1237, 1
      %v1239 = vadd.f32 %v1237, %v1238
      %s1240 = vtos %v1239
      %v1241 = vstv %s1240
      %1242 = vst [vmem:[#allocation8] sm:$0xff] %v1241
    $region25: #{tpu_custom_call.1} parent=1 // pred_fallthru
      _
    // Predicated region
    $region26: #{tpu_custom_call.1} parent=1 // pred_check
      _
    $region27: #{tpu_custom_call.1} parent=1 // pred_check_branch
      %1244 = sbr.rel (0) target = $region29
    $region28: #{tpu_custom_call.1} parent=1 // pred_region
      %s1246 = ssub.s32 128, 128
      %1247 = vsyncadd [#allocation5], %s1246
      %s1249 = sshll.u32 [#allocation8], 4
      %s1250 = int_to_ptr.vmem [resolvable:$true] %s1249
      %1252 = dma.vmem_to_hbm [thread:$0]  %s1250, 128, %s2, [#allocation5]
    $region29: #{tpu_custom_call.1} parent=1 // pred_fallthru
      _
    // Predicated region
    $region30: #{tpu_custom_call.1} parent=1 // pred_check
      _
    $region31: #{tpu_custom_call.1} parent=1 // pred_check_branch
      %1254 = sbr.rel (0) target = $region33
    $region32: #{tpu_custom_call.1} parent=1 // pred_region
      %1255 = dma.done [#allocation5], 128
    $region33: #{tpu_custom_call.1} parent=1 // pred_fallthru
      _
    %1256 = vsyncpa [#allocation4], 1
    %1257 = vsyncpa [#allocation7], 1
    %1258 = vsyncpa [#allocation5], 1

</llo_original>
